<compile_context>
chip_gen: v5e
topology: v5e:2x2
jax: 0.10.0
libtpu: 0.0.40
codegen_flags: <defaults>
</compile_context>

<pallas_src>
import functools

import numpy as np
import jax
import jax.numpy as jnp
from jax import lax
from jax.experimental import pallas as pl
from jax.experimental.pallas import tpu as pltpu


# ----------------------------- Pallas kernel ------------------------------ #

def _conv_kernel(x_ref, w_ref, o_ref):
    """One output tile: a single MXU matmul.

    x_ref: [M, Kpad]    bf16  (KH-unfolded, K-padded input rows)
    w_ref: [Kpad, Npad] bf16  (stacked per-kh scattered conv matrix)
    o_ref: [M, Npad]    f32   (lane-dense output slab)
    """
    o_ref[...] = jnp.dot(x_ref[...], w_ref[...],
                         preferred_element_type=jnp.float32)


def _round_up(v, m):
    return ((v + m - 1) // m) * m


# ------------------------------ wrapper ------------------------------------ #

def simple_conv_forward(x, weight, *, stride, padding, dilation, groups,
                        fold_batch=False):
    """Conv2d forward (bias=False), NCHW in / NCHW out, matching PyTorch."""
    N, C, H, W = x.shape
    OC, Cg, KH, KW = weight.shape
    assert C == Cg * groups and OC % groups == 0
    G = groups
    OCg = OC // groups
    OH = (H + 2 * padding - dilation * (KH - 1) - 1) // stride + 1
    OW = (W + 2 * padding - dilation * (KW - 1) - 1) // stride + 1
    Hp, Wp = H + 2 * padding, W + 2 * padding

    # ---------------- layout plumbing (tiny tensors, fused by XLA) ----------
    # Input: NCHW f32 -> [G, N, Hp, Wp*Cg] bf16, spatially pre-padded.
    x_nhwc = jnp.transpose(x, (0, 2, 3, 1)).astype(jnp.bfloat16)          # [N,H,W,C]
    x_pad = jnp.pad(x_nhwc, ((0, 0), (padding, padding), (padding, padding), (0, 0)))
    x_g = x_pad.reshape(N, Hp, Wp, G, Cg).transpose(3, 0, 1, 2, 4)        # [G,N,Hp,Wp,Cg]
    x_g = x_g.reshape(G, N, Hp, Wp * Cg)

    # Unfold KH onto the lane axis:
    # x_unf[g, n, oh, kh*Wp*Cg + wi*Cg + c] = x_pad[g, n, oh*stride + kh*dilation, wi, c]
    row_hi = (OH - 1) * stride + 1
    x_unf = jnp.concatenate(
        [lax.slice_in_dim(x_g, kh * dilation, kh * dilation + row_hi,
                          stride=stride, axis=2)
         for kh in range(KH)], axis=-1)                                    # [G,N,OH,KH*Wp*Cg]

    Kdim = KH * Wp * Cg
    Kpad = _round_up(max(Kdim, 128), 128)       # 216 -> 256 for driver shapes
    OWOC = OW * OCg
    Npad = _round_up(max(OWOC, 128), 128)       # already 128 for driver shapes

    if Kpad > Kdim:
        x_unf = jnp.pad(x_unf, ((0, 0), (0, 0), (0, 0), (0, Kpad - Kdim)))

    # Weights: [OC, Cg, KH, KW] -> stacked conv matrix
    # w_mat[g, kh*Wp*Cg + wi*Cg + c, ow*OCg + ocg] = w[g*OCg+ocg, c, kh, kw]
    #                                                iff wi == ow*stride + kw*dilation.
    sel = np.zeros((KW, Wp, OW), np.float32)
    for kw in range(KW):
        for ow in range(OW):
            sel[kw, ow * stride + kw * dilation, ow] = 1.0
    w_r = weight.reshape(G, OCg, Cg, KH, KW).transpose(0, 3, 4, 2, 1)      # [G,KH,KW,Cg,OCg]
    w_mat = jnp.einsum('xwo,ghxcf->ghwcof', jnp.asarray(sel), w_r)         # [G,KH,Wp,Cg,OW,OCg]
    w_mat = w_mat.reshape(G, Kdim, OWOC)
    w_mat = jnp.pad(w_mat, ((0, 0), (0, Kpad - Kdim), (0, Npad - OWOC)))
    w_mat = w_mat.astype(jnp.bfloat16)                                     # [G,Kpad,Npad]

    if fold_batch:
        # Single-TC chips (v5e/v6e): fold batch into the matmul M dim.
        M = N * OH
        x_k = x_unf.reshape(G, M, Kpad)
        grid = (G,)
        in_specs = [
            pl.BlockSpec((None, M, Kpad), lambda g: (g, 0, 0)),
            pl.BlockSpec((None, Kpad, Npad), lambda g: (g, 0, 0)),
        ]
        out_specs = pl.BlockSpec((None, M, Npad), lambda g: (g, 0, 0))
        out_shape = jax.ShapeDtypeStruct((G, M, Npad), jnp.float32)
        dims = ("parallel",)
    else:
        # v7x (2 TCs): keep the batch as a parallel grid axis.
        x_k = x_unf
        grid = (G, N)
        in_specs = [
            pl.BlockSpec((None, None, OH, Kpad), lambda g, n: (g, n, 0, 0)),
            # group's weight slab stays resident across the batch axis
            pl.BlockSpec((None, Kpad, Npad), lambda g, n: (g, 0, 0)),
        ]
        out_specs = pl.BlockSpec((None, None, OH, Npad), lambda g, n: (g, n, 0, 0))
        out_shape = jax.ShapeDtypeStruct((G, N, OH, Npad), jnp.float32)
        dims = ("parallel", "parallel")

    out = pl.pallas_call(
        _conv_kernel,
        out_shape=out_shape,
        grid_spec=pltpu.PrefetchScalarGridSpec(
            num_scalar_prefetch=0,
            grid=grid,
            in_specs=in_specs,
            out_specs=out_specs,
        ),
        compiler_params=pltpu.CompilerParams(dimension_semantics=dims),
    )(x_k, w_mat)

    # -> NCHW [N, OC, OH, OW] (single small transpose, pad columns sliced off).
    out = out.reshape(G, N, OH, Npad)[..., :OWOC].reshape(G, N, OH, OW, OCg)
    out = jnp.transpose(out, (1, 0, 4, 2, 3)).reshape(N, OC, OH, OW)
    return out


# ------------------------------ driver ------------------------------------ #

if __name__ == "__main__":
    # Module hyper-parameters (groups=1 so the module's weight reshape is valid).
    in_ch, out_ch, kernel_size = 4, 8, 3
    stride, padding, groups, dilation, wprec = 1, 1, 1, 1, 4

    # Deterministic integer-valued weights, mirroring SimpleConv.__init__.
    max_int = 2 ** wprec - 1
    rng = np.random.default_rng(0)
    w_data = rng.integers(0, max_int + 1,
                          size=in_ch * out_ch * kernel_size * kernel_size)
    weight = jnp.asarray(
        w_data.astype(np.float32).reshape(out_ch, in_ch, kernel_size, kernel_size))

    # Deterministic input, NCHW.
    x = jax.random.normal(jax.random.PRNGKey(0), (2, in_ch, 16, 16), dtype=jnp.float32)

    # Reference: same conv in f32 on the bf16-rounded operands (the kernel uses
    # bf16 MXU operands with f32 accumulation), NCHW semantics as torch Conv2d.
    x_bf = x.astype(jnp.bfloat16).astype(jnp.float32)
    w_bf = weight.astype(jnp.bfloat16).astype(jnp.float32)
    ref = lax.conv_general_dilated(
        x_bf, w_bf,
        window_strides=(stride, stride),
        padding=((padding, padding), (padding, padding)),
        rhs_dilation=(dilation, dilation),
        dimension_numbers=("NCHW", "OIHW", "NCHW"),
        feature_group_count=groups,
        precision=lax.Precision.HIGHEST,
    )

    # v7x-style path: grid=(G, N), both axes parallel.
    fwd = jax.jit(functools.partial(simple_conv_forward, stride=stride,
                                    padding=padding, dilation=dilation,
                                    groups=groups, fold_batch=False))
    out = jax.block_until_ready(fwd(x, weight))
    assert out.shape == ref.shape, (out.shape, ref.shape)
    np.testing.assert_allclose(np.asarray(out), np.asarray(ref),
                               rtol=1e-3, atol=1e-3)

    # Single-TC (v5e/v6e) path: batch folded into M, grid=(G,).
    fwd_fold = jax.jit(functools.partial(simple_conv_forward, stride=stride,
                                         padding=padding, dilation=dilation,
                                         groups=groups, fold_batch=True))
    out_fold = jax.block_until_ready(fwd_fold(x, weight))
    np.testing.assert_allclose(np.asarray(out_fold), np.asarray(ref),
                               rtol=1e-3, atol=1e-3)

    print("KERNEL_OK")
</pallas_src>

<mosaic_0001>
module attributes {stable_mosaic.version = 11 : i64} {
  func.func @_conv_kernel(%arg0: i32, %arg1: i32, %arg2: memref<1x1x16x256xbf16, #tpu.memory_space<vmem>>, %arg3: memref<1x256x128xbf16, #tpu.memory_space<vmem>>, %arg4: memref<1x1x16x128xf32, #tpu.memory_space<vmem>>) attributes {dimension_semantics = [#tpu.dimension_semantics<parallel>, #tpu.dimension_semantics<parallel>], iteration_bounds = array<i64: 1, 2>, scalar_prefetch = 0 : i64, scratch_operands = 0 : i64, tpu.core_type = #tpu.core_type<tc>, window_params = [{transform_indices = @transform_0, window_bounds = array<i64: 1, 1, 16, 256>}, {transform_indices = @transform_1, window_bounds = array<i64: 1, 256, 128>}, {transform_indices = @transform_2, window_bounds = array<i64: 1, 1, 16, 128>}]} {
    %c0 = arith.constant 0 : index
    %c0_0 = arith.constant 0 : index
    %c0_1 = arith.constant 0 : index
    %c0_2 = arith.constant 0 : index
    %0 = vector.load %arg2[%c0, %c0_0, %c0_1, %c0_2] : memref<1x1x16x256xbf16, #tpu.memory_space<vmem>>, vector<1x1x16x256xbf16>
    %1 = vector.shape_cast %0 : vector<1x1x16x256xbf16> to vector<16x256xbf16>
    %c0_3 = arith.constant 0 : index
    %c0_4 = arith.constant 0 : index
    %c0_5 = arith.constant 0 : index
    %2 = vector.load %arg3[%c0_3, %c0_4, %c0_5] : memref<1x256x128xbf16, #tpu.memory_space<vmem>>, vector<1x256x128xbf16>
    %3 = vector.shape_cast %2 : vector<1x256x128xbf16> to vector<256x128xbf16>
    %cst = arith.constant dense<0.000000e+00> : vector<16x128xf32>
    %4 = tpu.matmul %1, %3, %cst {dimension_numbers = #tpu.dot_dimension_numbers<[1], [0], [0], [1], [0, 0, 1, 1], [], []>} : vector<16x256xbf16>, vector<256x128xbf16>, vector<16x128xf32> -> vector<16x128xf32>
    %c0_6 = arith.constant 0 : index
    %c0_7 = arith.constant 0 : index
    %c0_8 = arith.constant 0 : index
    %c0_9 = arith.constant 0 : index
    %5 = vector.load %arg4[%c0_6, %c0_7, %c0_8, %c0_9] : memref<1x1x16x128xf32, #tpu.memory_space<vmem>>, vector<1x1x16x128xf32>
    %6 = vector.shape_cast %5 : vector<1x1x16x128xf32> to vector<16x128xf32>
    %7 = vector.shape_cast %4 : vector<16x128xf32> to vector<1x1x16x128xf32>
    tpu.vector_store %arg4[%c0_6, %c0_7, %c0_8, %c0_9], %7 {strides = array<i32>} : memref<1x1x16x128xf32, #tpu.memory_space<vmem>>, vector<1x1x16x128xf32>,
    return
  }
  func.func @transform_0(%arg0: i32, %arg1: i32) -> (i32, i32, i32, i32) {
    %c0_i32 = arith.constant 0 : i32
    %c0_i32_0 = arith.constant 0 : i32
    %c0_i32_1 = arith.constant 0 : i32
    return %arg0, %arg1, %c0_i32, %c0_i32_0 : i32, i32, i32, i32
  }
  func.func @transform_1(%arg0: i32, %arg1: i32) -> (i32, i32, i32) {
    %c0_i32 = arith.constant 0 : i32
    %c0_i32_0 = arith.constant 0 : i32
    %c0_i32_1 = arith.constant 0 : i32
    return %arg0, %c0_i32, %c0_i32_0 : i32, i32, i32
  }
  func.func @transform_2(%arg0: i32, %arg1: i32) -> (i32, i32, i32, i32) {
    %c0_i32 = arith.constant 0 : i32
    %c0_i32_0 = arith.constant 0 : i32
    %c0_i32_1 = arith.constant 0 : i32
    return %arg0, %arg1, %c0_i32, %c0_i32_0 : i32, i32, i32, i32
  }
}

</mosaic_0001>

<llo_original>
// kernel: simple_conv_forward.1
$region0: #{simple_conv_forward.1}
  #allocation0 [shape = 'u32[]', space=smem, size = 0x4, offset = 0x4, fixed_abs, tag = 'smem constant byte address 0x4 - core index']
  #allocation1 [shape = 'u32[72,128]{1,0:T(1,128)}', space=vmem, size = 0x9000, scoped, tag = 'internal scratch']
  %s0 = inlined_call_operand.vmem [shape: bf16[1,2,16,256], index: 0, kind: input, shape index: {}]
  %s1 = inlined_call_operand.vmem [shape: bf16[1,256,128], index: 1, kind: input, shape index: {}]
  %s2 = inlined_call_operand.vmem [shape: f32[1,2,16,128], index: 2, kind: output, shape index: {}]
  %s3 = sld [smem:[#allocation0]]
  $region41: #{simple_conv_forward.1} parent=0
    _
  %s5 = ssub.s32 1, %s3
  %s6 = scalar_select 0, %s5, %s3
  loop: start=0, step=1, limit=4
  $region2: #{simple_conv_forward.1} parent=0 // loop_pre_header
    _
  $region3: #{simple_conv_forward.1} parent=0 // loop_header
    %s8 = sphi 0, %s12
    %p9 = scmp.ge.s32.totalorder %s8, 4
    %s15 = sphi 0, %s27
    %s16 = sphi 0, %s23
    %s17 = sphi 0, %s15
    %s18 = sphi 0, %s16
    %s19 = sphi 0, %s17
    %s20 = sphi 0, %s18
    %s32 = sphi 0, %s34
    %s35 = sphi 0, %s32
    %s36 = sphi 0, %s35
    %s52 = sphi 0, %s36
    %s58 = sphi 0, %s60
    %s61 = sphi 0, %s58
    %s62 = sphi 0, %s61
    %s78 = sphi 0, %s62
    %s86 = sphi 0, %s88
    %s89 = sphi 0, %s86
    %s90 = sphi 0, %s89
    %s106 = sphi 0, %s90
  $region4: #{simple_conv_forward.1} parent=0 // loop_header_branch
    %11 = sbr.rel (%p9) target = $region8
  $region5: #{simple_conv_forward.1} parent=0 // loop_body
    %s13 = ssub.s32 %s8, 1
    %s14 = ssub.s32 %s8, 2
    %s21 = sadd.s32 1, %s16
    %p22 = scmp.ge.s32.totalorder %s21, 2
    %s23 = scalar_select %p22, 0, %s21
    %s24 = sadd.s32 1, %s15
    %s25 = scalar_select %p22, %s24, %s15
    %p26 = scmp.ge.s32.totalorder %s25, 1
    %s27 = scalar_select %p26, 0, %s25
    %s28 = ssub.s32 %s15, %s27
    %s29 = ssub.s32 %s16, %s23
    %s30 = sor.u32 %s28, %s29
    %p31 = scmp.eq.s32.totalorder %s30, 0
    %s33 = sadd.s32 %s32, 1
    %s34 = scalar_select %p31, %s32, %s33
    %p37 = pneg %p31
    %p38 = scmp.eq.s32.totalorder %s8, 1
    %p39 = por %p37, %p38
    %p40 = scmp.ne.s32.totalorder %s32, %s35
    %p41 = scmp.eq.s32.totalorder %s8, 0
    %p42 = por %p40, %p41
    %p43 = scmp.ne.s32.totalorder %s32, %s35
    %p44 = scmp.eq.s32.totalorder %s13, 1
    %p45 = por %p43, %p44
    %p46 = scmp.ne.s32.totalorder %s35, %s36
    %p47 = scmp.eq.s32.totalorder %s13, 0
    %p48 = por %p46, %p47
    %p49 = scmp.ne.s32.totalorder %s35, %s36
    %p50 = scmp.eq.s32.totalorder %s14, 1
    %p51 = por %p49, %p50
    %p53 = scmp.ne.s32.totalorder %s36, %s52
    %p54 = scmp.eq.s32.totalorder %s14, 0
    %p55 = por %p53, %p54
    %s56 = ssub.s32 %s15, %s27
    %p57 = scmp.eq.s32.totalorder %s56, 0
    %s59 = sadd.s32 %s58, 1
    %s60 = scalar_select %p57, %s58, %s59
    %p63 = pneg %p57
    %p64 = scmp.eq.s32.totalorder %s8, 1
    %p65 = por %p63, %p64
    %p66 = scmp.ne.s32.totalorder %s58, %s61
    %p67 = scmp.eq.s32.totalorder %s8, 0
    %p68 = por %p66, %p67
    %p69 = scmp.ne.s32.totalorder %s58, %s61
    %p70 = scmp.eq.s32.totalorder %s13, 1
    %p71 = por %p69, %p70
    %p72 = scmp.ne.s32.totalorder %s61, %s62
    %p73 = scmp.eq.s32.totalorder %s13, 0
    %p74 = por %p72, %p73
    %p75 = scmp.ne.s32.totalorder %s61, %s62
    %p76 = scmp.eq.s32.totalorder %s14, 1
    %p77 = por %p75, %p76
    %p79 = scmp.ne.s32.totalorder %s62, %s78
    %p80 = scmp.eq.s32.totalorder %s14, 0
    %p81 = por %p79, %p80
    %s82 = ssub.s32 %s15, %s27
    %s83 = ssub.s32 %s16, %s23
    %s84 = sor.u32 %s82, %s83
    %p85 = scmp.eq.s32.totalorder %s84, 0
    %s87 = sadd.s32 %s86, 1
    %s88 = scalar_select %p85, %s86, %s87
    %p91 = pneg %p85
    %p92 = scmp.eq.s32.totalorder %s8, 1
    %p93 = por %p91, %p92
    %p94 = scmp.ne.s32.totalorder %s86, %s89
    %p95 = scmp.eq.s32.totalorder %s8, 0
    %p96 = por %p94, %p95
    %p97 = scmp.ne.s32.totalorder %s86, %s89
    %p98 = scmp.eq.s32.totalorder %s13, 1
    %p99 = por %p97, %p98
    %p100 = scmp.ne.s32.totalorder %s89, %s90
    %p101 = scmp.eq.s32.totalorder %s13, 0
    %p102 = por %p100, %p101
    %p103 = scmp.ne.s32.totalorder %s89, %s90
    %p104 = scmp.eq.s32.totalorder %s14, 1
    %p105 = por %p103, %p104
    %p107 = scmp.ne.s32.totalorder %s90, %s106
    %p108 = scmp.eq.s32.totalorder %s14, 0
    %p109 = por %p107, %p108
    %p110 = scmp.le.s32.totalorder 1, %s8
    %p111 = scmp.lt.s32.totalorder %s8, 3
    %p112 = pnand %p110, %p111
    %p113 = pneg %p112
    // Predicated region
    $region9: #{simple_conv_forward.1} parent=5 // pred_check
      _
    $region10: #{simple_conv_forward.1} parent=5 // pred_check_branch
      %115 = sbr.rel (%p112) target = $region12
    $region11: #{simple_conv_forward.1} parent=5 // pred_region
      %s116 = ssub.s32 %s8, 1
      // Predicated region
      $region13: #{simple_conv_forward.1} parent=11 // pred_check
        %p117 = pneg %p74
      $region14: #{simple_conv_forward.1} parent=11 // pred_check_branch
        %119 = sbr.rel (%p117) target = $region16
      $region15: #{simple_conv_forward.1} parent=11 // pred_region
        %p120 = scmp.lt.s32.totalorder %s17, 0
        %s121 = scalar_select %p120, %s17, 0
        %s122 = smul.addr %s121, 32
        %s123 = smul.addr %s122, 4
        %s124 = scalar_lea.vmem %s1, %s123
      $region16: #{simple_conv_forward.1} parent=11 // pred_fallthru
        _
    $region12: #{simple_conv_forward.1} parent=5 // pred_fallthru
      _
    %p125 = scmp.lt.s32.totalorder %s8, 2
    // Predicated region
    $region17: #{simple_conv_forward.1} parent=5 // pred_check
      %p126 = pneg %p125
    $region18: #{simple_conv_forward.1} parent=5 // pred_check_branch
      %128 = sbr.rel (%p126) target = $region20
    $region19: #{simple_conv_forward.1} parent=5 // pred_region
      // Predicated region
      $region21: #{simple_conv_forward.1} parent=19 // pred_check
        %p129 = pneg %p42
      $region22: #{simple_conv_forward.1} parent=19 // pred_check_branch
        %131 = sbr.rel (%p129) target = $region24
      $region23: #{simple_conv_forward.1} parent=19 // pred_region
        %p132 = scmp.lt.s32.totalorder %s15, 0
        %s133 = scalar_select %p132, %s15, 0
        %p134 = scmp.lt.s32.totalorder %s16, 1
        %s135 = scalar_select %p134, %s16, 1
        %s136 = smul.addr %s135, 4
        %s137 = smul.addr %s133, 8
        %s138 = sadd.s32 %s136, %s137
        %s139 = smul.addr %s138, 4
        %s140 = scalar_lea.vmem %s0, %s139
      $region24: #{simple_conv_forward.1} parent=19 // pred_fallthru
        _
    $region20: #{simple_conv_forward.1} parent=5 // pred_fallthru
      _
    %p141 = scmp.le.s32.totalorder 1, %s8
    %p142 = scmp.lt.s32.totalorder %s8, 3
    %p143 = pnand %p141, %p142
    %p144 = pneg %p143
    // Predicated region
    $region25: #{simple_conv_forward.1} parent=5 // pred_check
      _
    $region26: #{simple_conv_forward.1} parent=5 // pred_check_branch
      %146 = sbr.rel (%p143) target = $region28
    $region27: #{simple_conv_forward.1} parent=5 // pred_region
      %s147 = ssub.s32 %s8, 1
      %p148 = scmp.lt.s32.totalorder %s17, 0
      %s149 = scalar_select %p148, %s17, 0
      %p150 = scmp.lt.s32.totalorder %s18, 1
      %s151 = scalar_select %p150, %s18, 1
      %s152 = smul.addr %s151, 4
      %s153 = smul.addr %s149, 8
      %s154 = sadd.s32 %s152, %s153
      %s155 = smul.addr %s154, 4
      %s156 = scalar_lea.vmem %s0, %s155
      %p157 = pneg %p48
      %p158 = pneg %p45
      %p159 = scmp.lt.s32.totalorder %s17, 0
      %s160 = scalar_select %p159, %s17, 0
      %s161 = smul.addr %s160, 32
      %s162 = smul.addr %s161, 4
      %s163 = scalar_lea.vmem %s1, %s162
      %p164 = pneg %p74
      %p165 = pneg %p71
      %p166 = pneg %p102
      %p167 = pneg %p99
      %p168 = scmp.lt.s32.totalorder %s17, 0
      %s169 = scalar_select %p168, %s17, 0
      %p170 = scmp.lt.s32.totalorder %s18, 1
      %s171 = scalar_select %p170, %s18, 1
      %s172 = smul.addr %s171, 2
      %s173 = smul.addr %s169, 4
      %s174 = sadd.s32 %s172, %s173
      %s175 = smul.addr %s174, 8
      %s176 = scalar_lea.vmem %s2, %s175
      %p177 = scmp.lt.s32.totalorder %s17, 0
      %s178 = scalar_select %p177, %s17, 0
      %p179 = scmp.lt.s32.totalorder %s18, 1
      %s180 = scalar_select %p179, %s18, 1
      %s181 = smul.addr %s180, 4
      %s182 = smul.addr %s178, 8
      %s183 = sadd.s32 %s181, %s182
      %s184 = smul.addr %s183, 4
      %s185 = scalar_lea.vmem %s0, %s184
      %p186 = scmp.lt.s32.totalorder %s17, 0
      %s187 = scalar_select %p186, %s17, 0
      %s188 = smul.addr %s187, 32
      %s189 = smul.addr %s188, 4
      %s190 = scalar_lea.vmem %s1, %s189
      %p191 = scmp.lt.s32.totalorder %s17, 0
      %s192 = scalar_select %p191, %s17, 0
      %p193 = scmp.lt.s32.totalorder %s18, 1
      %s194 = scalar_select %p193, %s18, 1
      %s195 = smul.addr %s194, 2
      %s196 = smul.addr %s192, 4
      %s197 = sadd.s32 %s195, %s196
      %s198 = smul.addr %s197, 8
      %s199 = scalar_lea.vmem %s2, %s198
      %v200 = vld [vmem:[%s185] sm:$0xff]
      %v201 = vld [vmem:[%s185 + $0x8] sm:$0xff]
      %v202 = vld [vmem:[%s190] sm:$0xf]
      %v203 = vld [vmem:[%s190 + $0x4] sm:$0xf]
      %v204 = vld [vmem:[%s190 + $0x8] sm:$0xf]
      %v205 = vld [vmem:[%s190 + $0xc] sm:$0xf]
      %v206 = vld [vmem:[%s190 + $0x10] sm:$0xf]
      %v207 = vld [vmem:[%s190 + $0x14] sm:$0xf]
      %v208 = vld [vmem:[%s190 + $0x18] sm:$0xf]
      %v209 = vld [vmem:[%s190 + $0x1c] sm:$0xf]
      %v210 = vld [vmem:[%s190 + $0x20] sm:$0xf]
      %v211 = vld [vmem:[%s190 + $0x24] sm:$0xf]
      %v212 = vld [vmem:[%s190 + $0x28] sm:$0xf]
      %v213 = vld [vmem:[%s190 + $0x2c] sm:$0xf]
      %v214 = vld [vmem:[%s190 + $0x30] sm:$0xf]
      %v215 = vld [vmem:[%s190 + $0x34] sm:$0xf]
      %v216 = vld [vmem:[%s190 + $0x38] sm:$0xf]
      %v217 = vld [vmem:[%s190 + $0x3c] sm:$0xf]
      %v218 = vld [vmem:[%s190 + $0x40] sm:$0xf]
      %v219 = vld [vmem:[%s190 + $0x44] sm:$0xf]
      %v220 = vld [vmem:[%s190 + $0x48] sm:$0xf]
      %v221 = vld [vmem:[%s190 + $0x4c] sm:$0xf]
      %v222 = vld [vmem:[%s190 + $0x50] sm:$0xf]
      %v223 = vld [vmem:[%s190 + $0x54] sm:$0xf]
      %v224 = vld [vmem:[%s190 + $0x58] sm:$0xf]
      %v225 = vld [vmem:[%s190 + $0x5c] sm:$0xf]
      %v226 = vld [vmem:[%s190 + $0x60] sm:$0xf]
      %v227 = vld [vmem:[%s190 + $0x64] sm:$0xf]
      %v228 = vld [vmem:[%s190 + $0x68] sm:$0xf]
      %v229 = vld [vmem:[%s190 + $0x6c] sm:$0xf]
      %v230 = vld [vmem:[%s190 + $0x70] sm:$0xf]
      %v231 = vld [vmem:[%s190 + $0x74] sm:$0xf]
      %v232 = vld [vmem:[%s190 + $0x78] sm:$0xf]
      %v233 = vld [vmem:[%s190 + $0x7c] sm:$0xf]
      %v236 = vunpack.c.l.b16 %v200
      %v237 = vunpack.c.h.b16 %v200
      %v238 = vunpack.c.l.b16 %v201
      %v239 = vunpack.c.h.b16 %v201
      %v240 = vpack.c.b16 %v238, %v236
      %v241 = vpack.c.b16 %v239, %v237
      %v276 = vunpack.c.l.b16 %v202
      %v277 = vunpack.c.l.b16 %v203
      %v278 = vunpack.c.l.b16 %v204
      %v279 = vunpack.c.l.b16 %v205
      %v280 = vunpack.c.l.b16 %v206
      %v281 = vunpack.c.l.b16 %v207
      %v282 = vunpack.c.l.b16 %v208
      %v283 = vunpack.c.l.b16 %v209
      %v284 = vunpack.c.l.b16 %v210
      %v285 = vunpack.c.l.b16 %v211
      %v286 = vunpack.c.l.b16 %v212
      %v287 = vunpack.c.l.b16 %v213
      %v288 = vunpack.c.l.b16 %v214
      %v289 = vunpack.c.l.b16 %v215
      %v290 = vunpack.c.l.b16 %v216
      %v291 = vunpack.c.l.b16 %v217
      %v292 = vunpack.c.l.b16 %v218
      %v293 = vunpack.c.l.b16 %v219
      %v294 = vunpack.c.l.b16 %v220
      %v295 = vunpack.c.l.b16 %v221
      %v296 = vunpack.c.l.b16 %v222
      %v297 = vunpack.c.l.b16 %v223
      %v298 = vunpack.c.l.b16 %v224
      %v299 = vunpack.c.l.b16 %v225
      %v300 = vunpack.c.l.b16 %v226
      %v301 = vunpack.c.l.b16 %v227
      %v302 = vunpack.c.l.b16 %v228
      %v303 = vunpack.c.l.b16 %v229
      %v304 = vunpack.c.l.b16 %v230
      %v305 = vunpack.c.l.b16 %v231
      %v306 = vunpack.c.l.b16 %v232
      %v307 = vunpack.c.l.b16 %v233
      %v308 = vpack.c.b16 %v277, %v276
      %v309 = vpack.c.b16 %v279, %v278
      %v310 = vpack.c.b16 %v281, %v280
      %v311 = vpack.c.b16 %v283, %v282
      %v312 = vpack.c.b16 %v285, %v284
      %v313 = vpack.c.b16 %v287, %v286
      %v314 = vpack.c.b16 %v289, %v288
      %v315 = vpack.c.b16 %v291, %v290
      %v316 = vpack.c.b16 %v293, %v292
      %v317 = vpack.c.b16 %v295, %v294
      %v318 = vpack.c.b16 %v297, %v296
      %v319 = vpack.c.b16 %v299, %v298
      %v320 = vpack.c.b16 %v301, %v300
      %v321 = vpack.c.b16 %v303, %v302
      %v322 = vpack.c.b16 %v305, %v304
      %v323 = vpack.c.b16 %v307, %v306
      %340 = vmatpush.bf16.msra.mxu0 %v315
      %341 = vmatpush.bf16.msra.mxu0 %v314
      %342 = vmatpush.bf16.msra.mxu0 %v313
      %343 = vmatpush.bf16.msra.mxu0 %v312
      %344 = vmatpush.bf16.msra.mxu0 %v311
      %345 = vmatpush.bf16.msra.mxu0 %v310
      %346 = vmatpush.bf16.msra.mxu0 %v309
      %347 = vmatpush.bf16.msra.mxu0 %v308
      %348 = vmatmul.bf16.gmra.mxu0 %v240
      %v349 = vpop.f32.mrf.mxu0
      %v350 = vadd.f32 0.0, %v349
      %v351 = vpop.f32.mrf.mxu0
      %v352 = vadd.f32 0.0, %v351
      %353 = vdwg.mxu0
      %354 = vmatpush.bf16.msra.mxu0 %v323
      %355 = vmatpush.bf16.msra.mxu0 %v322
      %356 = vmatpush.bf16.msra.mxu0 %v321
      %357 = vmatpush.bf16.msra.mxu0 %v320
      %358 = vmatpush.bf16.msra.mxu0 %v319
      %359 = vmatpush.bf16.msra.mxu0 %v318
      %360 = vmatpush.bf16.msra.mxu0 %v317
      %361 = vmatpush.bf16.msra.mxu0 %v316
      %362 = vmatmul.bf16.gmra.mxu0 %v241
      %v363 = vpop.f32.mrf.mxu0
      %v364 = vadd.f32 %v350, %v363
      %v365 = vpop.f32.mrf.mxu0
      %v366 = vadd.f32 %v352, %v365
      %367 = vdwg.mxu0
      %368 = vst [vmem:[%s199] sm:$0xff] %v364
      %369 = vst [vmem:[%s199 + $0x8] sm:$0xff] %v366
      %p370 = scmp.lt.s32.totalorder %s17, 0
      %s371 = scalar_select %p370, %s17, 0
      %p372 = scmp.lt.s32.totalorder %s18, 1
      %s373 = scalar_select %p372, %s18, 1
      %s374 = smul.addr %s373, 2
      %s375 = smul.addr %s371, 4
      %s376 = sadd.s32 %s374, %s375
      %s377 = smul.addr %s376, 8
      %s378 = scalar_lea.vmem %s2, %s377
      // Predicated region
      $region29: #{simple_conv_forward.1} parent=27 // pred_check
        %p379 = pneg %p99
      $region30: #{simple_conv_forward.1} parent=27 // pred_check_branch
        %381 = sbr.rel (%p379) target = $region32
      $region31: #{simple_conv_forward.1} parent=27 // pred_region
        _
      $region32: #{simple_conv_forward.1} parent=27 // pred_fallthru
        _
    $region28: #{simple_conv_forward.1} parent=5 // pred_fallthru
      _
    %p382 = scmp.le.s32.totalorder 2, %s8
    // Predicated region
    $region33: #{simple_conv_forward.1} parent=5 // pred_check
      %p383 = pneg %p382
    $region34: #{simple_conv_forward.1} parent=5 // pred_check_branch
      %385 = sbr.rel (%p383) target = $region36
    $region35: #{simple_conv_forward.1} parent=5 // pred_region
      %s386 = ssub.s32 %s8, 2
      // Predicated region
      $region37: #{simple_conv_forward.1} parent=35 // pred_check
        %p387 = pneg %p105
      $region38: #{simple_conv_forward.1} parent=35 // pred_check_branch
        %389 = sbr.rel (%p387) target = $region40
      $region39: #{simple_conv_forward.1} parent=35 // pred_region
        %p390 = scmp.lt.s32.totalorder %s19, 0
        %s391 = scalar_select %p390, %s19, 0
        %p392 = scmp.lt.s32.totalorder %s20, 1
        %s393 = scalar_select %p392, %s20, 1
        %s394 = smul.addr %s393, 2
        %s395 = smul.addr %s391, 4
        %s396 = sadd.s32 %s394, %s395
        %s397 = smul.addr %s396, 8
        %s398 = scalar_lea.vmem %s2, %s397
      $region40: #{simple_conv_forward.1} parent=35 // pred_fallthru
        _
    $region36: #{simple_conv_forward.1} parent=5 // pred_fallthru
      _
  $region6: #{simple_conv_forward.1} parent=0 // loop_footer
    %s12 = sadd.s32 1, %s8
  $region7: #{simple_conv_forward.1} parent=0 // loop_footer_branch
    %7 = sbr.rel target = $region3
  $region8: #{simple_conv_forward.1} parent=0 // loop_exit
    _

</llo_original>
